<compile_context>
chip_gen: v7x
topology: tpu7x:2x2x1
jax: 0.10.0
libtpu: 0.0.40
codegen_flags: <defaults>
</compile_context>

<pallas_src>
import functools

import numpy as np
import jax
import jax.numpy as jnp
from jax.experimental import pallas as pl
from jax.experimental.pallas import tpu as pltpu

_LANE = 128
_SUBLANE = 8


def _round_up(x, m):
    return ((x + m - 1) // m) * m


def parser_mlp_kernel(x_ref, w1_ref, b1_ref, w2_ref, b2_ref, out_ref):
    """One batch tile: (TB,FE)@(FE,Hp)+b1 -> ReLU -> (TB,Hp)@(Hp,Cp)+b2."""
    x = x_ref[...]                                                  # (TB, FE) f32
    h = jnp.dot(x, w1_ref[...], preferred_element_type=jnp.float32)
    h = jnp.maximum(h + b1_ref[...], 0.0)                           # bias + ReLU
    # TODO(synk): nn.Dropout is identity in eval mode; training-mode dropout could
    # be added with pltpu.prng_seed + pltpu.prng_random_bits if ever needed.
    out_ref[...] = (jnp.dot(h, w2_ref[...], preferred_element_type=jnp.float32)
                    + b2_ref[...])


def pad_params(w1, b1, w2, b2):
    """One-time (init-style) zero padding to MXU/lane-friendly shapes.

    H -> multiple of 256, C -> multiple of 128, FE -> multiple of 128.
    Zeros are exact no-ops through bias/ReLU/matmul; extra logit columns are
    sliced off after the kernel.
    """
    FE, H = w1.shape
    C = w2.shape[1]
    FEp = _round_up(FE, _LANE)
    Hp = _round_up(H, 2 * _LANE)
    Cp = _round_up(C, _LANE)
    w1p = jnp.zeros((FEp, Hp), jnp.float32).at[:FE, :H].set(w1)
    b1p = jnp.zeros((1, Hp), jnp.float32).at[0, :H].set(b1)
    w2p = jnp.zeros((Hp, Cp), jnp.float32).at[:H, :C].set(w2)
    b2p = jnp.zeros((1, Cp), jnp.float32).at[0, :C].set(b2)
    return w1p, b1p, w2p, b2p


@functools.partial(jax.jit, static_argnames=("n_classes",))
def parser_model_forward(w_idx, embeddings, w1p, b1p, w2p, b2p, *, n_classes):
    """Full forward pass. Embedding gather is a single fused XLA gather; the
    two-layer MLP runs in the batch-tiled Pallas kernel."""
    B, F = w_idx.shape
    _, E = embeddings.shape
    FEp, Hp = w1p.shape
    Cp = w2p.shape[1]
    FE = F * E

    # embedding_lookup: self.embeddings[w].view(B, -1)
    # TODO(synk): the review suggests fusing this gather into the kernel via
    # scalar prefetch; a per-(row, feature) in-kernel gather is B*F tiny (E*4 B)
    # transfers, which is slower than XLA's vectorized gather, so it stays here.
    x = jnp.take(embeddings, w_idx.reshape(-1), axis=0).reshape(B, FE)
    if FEp != FE:
        x = jnp.pad(x, ((0, 0), (0, FEp - FE)))

    # Batch tiling: full-height MXU tiles for real batches, >=8 (sublane) otherwise.
    TB = 128 if B >= 128 else _round_up(B, _SUBLANE)
    Bp = _round_up(B, TB)
    if Bp != B:
        x = jnp.pad(x, ((0, Bp - B), (0, 0)))

    logits_p = pl.pallas_call(
        parser_mlp_kernel,
        out_shape=jax.ShapeDtypeStruct((Bp, Cp), jnp.float32),
        grid=(Bp // TB,),
        in_specs=[
            pl.BlockSpec((TB, FEp), lambda i: (i, 0)),   # x tile (pipelined over batch)
            pl.BlockSpec((FEp, Hp), lambda i: (0, 0)),   # W1 resident in VMEM
            pl.BlockSpec((1, Hp),   lambda i: (0, 0)),   # b1 resident
            pl.BlockSpec((Hp, Cp),  lambda i: (0, 0)),   # W2 resident
            pl.BlockSpec((1, Cp),   lambda i: (0, 0)),   # b2 resident
        ],
        out_specs=pl.BlockSpec((TB, Cp), lambda i: (i, 0)),  # lane-dense writeback
        compiler_params=pltpu.CompilerParams(
            dimension_semantics=("parallel",)),          # megacore sharding on v7x
    )(x, w1p, b1p, w2p, b2p)

    return logits_p[:B, :n_classes]


def init_params(key, vocab_size, embed_size, n_features, hidden_size, n_classes):
    """Deterministic parameter init mirroring the PyTorch __init__ shapes."""
    k_emb, k_w1, k_b1, k_w2, k_b2 = jax.random.split(key, 5)

    embeddings = jax.random.normal(k_emb, (vocab_size, embed_size), jnp.float32)

    fan_in1, fan_out1 = embed_size * n_features, hidden_size
    limit1 = np.sqrt(6.0 / (fan_in1 + fan_out1))              # xavier_uniform_
    w1 = jax.random.uniform(k_w1, (fan_in1, fan_out1), jnp.float32, -limit1, limit1)
    b1 = jax.random.uniform(k_b1, (hidden_size,), jnp.float32, 0.0, 1.0)  # uniform_

    fan_in2, fan_out2 = hidden_size, n_classes
    limit2 = np.sqrt(6.0 / (fan_in2 + fan_out2))
    w2 = jax.random.uniform(k_w2, (fan_in2, fan_out2), jnp.float32, -limit2, limit2)
    b2 = jax.random.uniform(k_b2, (n_classes,), jnp.float32, 0.0, 1.0)

    return embeddings, w1, b1, w2, b2


def reference_forward(w_idx, embeddings, w1, b1, w2, b2):
    B = w_idx.shape[0]
    x = embeddings[w_idx].reshape(B, -1)
    h = jnp.maximum(x @ w1 + b1, 0.0)
    return h @ w2 + b2


if __name__ == "__main__":
    # Small shapes consistent with the module's forward.
    batch_size = 8
    n_features = 36
    embed_size = 32
    hidden_size = 200
    n_classes = 3
    vocab_size = 100

    key = jax.random.PRNGKey(0)
    k_params, k_idx = jax.random.split(key)

    embeddings, w1, b1, w2, b2 = init_params(
        k_params, vocab_size, embed_size, n_features, hidden_size, n_classes)
    w1p, b1p, w2p, b2p = pad_params(w1, b1, w2, b2)   # one-time, init-style padding

    w_idx = jax.random.randint(k_idx, (batch_size, n_features), 0, vocab_size,
                               dtype=jnp.int32)

    logits = parser_model_forward(w_idx, embeddings, w1p, b1p, w2p, b2p,
                                  n_classes=n_classes)
    logits = jax.block_until_ready(logits)

    ref = reference_forward(w_idx, embeddings, w1, b1, w2, b2)
    np.testing.assert_allclose(np.asarray(logits), np.asarray(ref),
                               rtol=1e-5, atol=1e-5)

    print("KERNEL_OK")
</pallas_src>

<mosaic_0001>
module attributes {stable_mosaic.version = 11 : i64} {
  func.func @parser_mlp_kernel(%arg0: i32, %arg1: memref<8x1152xf32, #tpu.memory_space<vmem>>, %arg2: memref<1152x256xf32, #tpu.memory_space<vmem>>, %arg3: memref<1x256xf32, #tpu.memory_space<vmem>>, %arg4: memref<256x128xf32, #tpu.memory_space<vmem>>, %arg5: memref<1x128xf32, #tpu.memory_space<vmem>>, %arg6: memref<8x128xf32, #tpu.memory_space<vmem>>) attributes {dimension_semantics = [#tpu.dimension_semantics<parallel>], iteration_bounds = array<i64: 1>, scalar_prefetch = 0 : i64, scratch_operands = 0 : i64, tpu.core_type = #tpu.core_type<tc>, window_params = [{transform_indices = @transform_0, window_bounds = array<i64: 8, 1152>}, {pipeline_mode = #tpu.pipeline_mode<synchronous>, transform_indices = @transform_1, window_bounds = array<i64: 1152, 256>}, {pipeline_mode = #tpu.pipeline_mode<synchronous>, transform_indices = @transform_2, window_bounds = array<i64: 1, 256>}, {pipeline_mode = #tpu.pipeline_mode<synchronous>, transform_indices = @transform_3, window_bounds = array<i64: 256, 128>}, {pipeline_mode = #tpu.pipeline_mode<synchronous>, transform_indices = @transform_4, window_bounds = array<i64: 1, 128>}, {transform_indices = @transform_5, window_bounds = array<i64: 8, 128>}]} {
    %c0 = arith.constant 0 : index
    %c0_0 = arith.constant 0 : index
    %0 = vector.load %arg1[%c0, %c0_0] : memref<8x1152xf32, #tpu.memory_space<vmem>>, vector<8x1152xf32>
    %c0_1 = arith.constant 0 : index
    %c0_2 = arith.constant 0 : index
    %1 = vector.load %arg2[%c0_1, %c0_2] : memref<1152x256xf32, #tpu.memory_space<vmem>>, vector<1152x256xf32>
    %cst = arith.constant dense<0.000000e+00> : vector<8x256xf32>
    %2 = tpu.matmul %0, %1, %cst {dimension_numbers = #tpu.dot_dimension_numbers<[1], [0], [0], [1], [0, 0, 1, 1], [], []>} : vector<8x1152xf32>, vector<1152x256xf32>, vector<8x256xf32> -> vector<8x256xf32>
    %c0_3 = arith.constant 0 : index
    %c0_4 = arith.constant 0 : index
    %3 = vector.load %arg3[%c0_3, %c0_4] : memref<1x256xf32, #tpu.memory_space<vmem>>, vector<1x256xf32>
    %4 = vector.broadcast %3 : vector<1x256xf32> to vector<8x256xf32>
    %5 = arith.addf %2, %4 : vector<8x256xf32>
    %cst_5 = arith.constant 0.000000e+00 : f32
    %6 = vector.broadcast %cst_5 : f32 to vector<8x256xf32>
    %7 = arith.maximumf %5, %6 : vector<8x256xf32>
    %c0_6 = arith.constant 0 : index
    %c0_7 = arith.constant 0 : index
    %8 = vector.load %arg4[%c0_6, %c0_7] : memref<256x128xf32, #tpu.memory_space<vmem>>, vector<256x128xf32>
    %cst_8 = arith.constant dense<0.000000e+00> : vector<8x128xf32>
    %9 = tpu.matmul %7, %8, %cst_8 {dimension_numbers = #tpu.dot_dimension_numbers<[1], [0], [0], [1], [0, 0, 1, 1], [], []>} : vector<8x256xf32>, vector<256x128xf32>, vector<8x128xf32> -> vector<8x128xf32>
    %c0_9 = arith.constant 0 : index
    %c0_10 = arith.constant 0 : index
    %10 = vector.load %arg5[%c0_9, %c0_10] : memref<1x128xf32, #tpu.memory_space<vmem>>, vector<1x128xf32>
    %11 = vector.broadcast %10 : vector<1x128xf32> to vector<8x128xf32>
    %12 = arith.addf %9, %11 : vector<8x128xf32>
    %c0_11 = arith.constant 0 : index
    %c0_12 = arith.constant 0 : index
    %13 = vector.load %arg6[%c0_11, %c0_12] : memref<8x128xf32, #tpu.memory_space<vmem>>, vector<8x128xf32>
    tpu.vector_store %arg6[%c0_11, %c0_12], %12 {strides = array<i32>} : memref<8x128xf32, #tpu.memory_space<vmem>>, vector<8x128xf32>,
    return
  }
  func.func @transform_0(%arg0: i32) -> (i32, i32) {
    %c0_i32 = arith.constant 0 : i32
    %c0_i32_0 = arith.constant 0 : i32
    return %arg0, %c0_i32 : i32, i32
  }
  func.func @transform_1(%arg0: i32) -> (i32, i32) {
    %c0_i32 = arith.constant 0 : i32
    %c0_i32_0 = arith.constant 0 : i32
    %c0_i32_1 = arith.constant 0 : i32
    return %c0_i32, %c0_i32_0 : i32, i32
  }
  func.func @transform_2(%arg0: i32) -> (i32, i32) {
    %c0_i32 = arith.constant 0 : i32
    %c0_i32_0 = arith.constant 0 : i32
    %c0_i32_1 = arith.constant 0 : i32
    return %c0_i32, %c0_i32_0 : i32, i32
  }
  func.func @transform_3(%arg0: i32) -> (i32, i32) {
    %c0_i32 = arith.constant 0 : i32
    %c0_i32_0 = arith.constant 0 : i32
    %c0_i32_1 = arith.constant 0 : i32
    return %c0_i32, %c0_i32_0 : i32, i32
  }
  func.func @transform_4(%arg0: i32) -> (i32, i32) {
    %c0_i32 = arith.constant 0 : i32
    %c0_i32_0 = arith.constant 0 : i32
    %c0_i32_1 = arith.constant 0 : i32
    return %c0_i32, %c0_i32_0 : i32, i32
  }
  func.func @transform_5(%arg0: i32) -> (i32, i32) {
    %c0_i32 = arith.constant 0 : i32
    %c0_i32_0 = arith.constant 0 : i32
    return %arg0, %c0_i32 : i32, i32
  }
}

</mosaic_0001>

<llo_original>
// kernel: parser_model_forward.1
$region0: #{parser_model_forward.1}
  #allocation0 [shape = 'u32[]', space=smem, size = 0x4, offset = 0x4, fixed_abs, tag = 'smem constant byte address 0x4 - core index']
  #allocation1 [shape = 'u32[144,128]{1,0:T(1,128)}', space=vmem, size = 0x12000, scoped, tag = 'internal scratch']
  %s0 = inlined_call_operand.vmem [shape: f32[8,1152], index: 0, kind: input, shape index: {}]
  %s1 = inlined_call_operand.vmem [shape: f32[1152,256], index: 1, kind: input, shape index: {}]
  %s2 = inlined_call_operand.vmem [shape: f32[1,256], index: 2, kind: input, shape index: {}]
  %s3 = inlined_call_operand.vmem [shape: f32[256,128], index: 3, kind: input, shape index: {}]
  %s4 = inlined_call_operand.vmem [shape: f32[1,128], index: 4, kind: input, shape index: {}]
  %s5 = inlined_call_operand.vmem [shape: f32[8,128], index: 5, kind: output, shape index: {}]
  %s6 = sld [smem:[#allocation0]]
  $region30: #{parser_model_forward.1} parent=0
    _
  %s8 = ssub.s32 1, %s6
  %s9 = scalar_select 0, %s8, %s6
  // Predicated region
  $region2: #{parser_model_forward.1} parent=0 // pred_check
    _
  $region3: #{parser_model_forward.1} parent=0 // pred_check_branch
    %11 = sbr.rel (0) target = $region5
  $region4: #{parser_model_forward.1} parent=0 // pred_region
    _
  $region5: #{parser_model_forward.1} parent=0 // pred_fallthru
    _
  // Predicated region
  $region6: #{parser_model_forward.1} parent=0 // pred_check
    _
  $region7: #{parser_model_forward.1} parent=0 // pred_check_branch
    %13 = sbr.rel (0) target = $region9
  $region8: #{parser_model_forward.1} parent=0 // pred_region
    _
  $region9: #{parser_model_forward.1} parent=0 // pred_fallthru
    _
  // Predicated region
  $region10: #{parser_model_forward.1} parent=0 // pred_check
    _
  $region11: #{parser_model_forward.1} parent=0 // pred_check_branch
    %15 = sbr.rel (0) target = $region13
  $region12: #{parser_model_forward.1} parent=0 // pred_region
    _
  $region13: #{parser_model_forward.1} parent=0 // pred_fallthru
    _
  // Predicated region
  $region14: #{parser_model_forward.1} parent=0 // pred_check
    _
  $region15: #{parser_model_forward.1} parent=0 // pred_check_branch
    %17 = sbr.rel (0) target = $region17
  $region16: #{parser_model_forward.1} parent=0 // pred_region
    _
  $region17: #{parser_model_forward.1} parent=0 // pred_fallthru
    _
  // Predicated region
  $region18: #{parser_model_forward.1} parent=0 // pred_check
    _
  $region19: #{parser_model_forward.1} parent=0 // pred_check_branch
    %19 = sbr.rel (0) target = $region21
  $region20: #{parser_model_forward.1} parent=0 // pred_region
    _
  $region21: #{parser_model_forward.1} parent=0 // pred_fallthru
    _
  %v20 = vld [vmem:[%s0] sm:$0xff]
  %v21 = vld [vmem:[%s0 + $0x8] sm:$0xff]
  %v22 = vld [vmem:[%s0 + $0x10] sm:$0xff]
  %v23 = vld [vmem:[%s0 + $0x18] sm:$0xff]
  %v24 = vld [vmem:[%s0 + $0x20] sm:$0xff]
  %v25 = vld [vmem:[%s0 + $0x28] sm:$0xff]
  %v26 = vld [vmem:[%s0 + $0x30] sm:$0xff]
  %v27 = vld [vmem:[%s0 + $0x38] sm:$0xff]
  %v28 = vld [vmem:[%s0 + $0x40] sm:$0xff]
  %v29 = vld [vmem:[%s1] sm:$0xff]
  %v30 = vld [vmem:[%s1 + $0x8] sm:$0xff]
  %v31 = vld [vmem:[%s1 + $0x10] sm:$0xff]
  %v32 = vld [vmem:[%s1 + $0x18] sm:$0xff]
  %v33 = vld [vmem:[%s1 + $0x20] sm:$0xff]
  %v34 = vld [vmem:[%s1 + $0x28] sm:$0xff]
  %v35 = vld [vmem:[%s1 + $0x30] sm:$0xff]
  %v36 = vld [vmem:[%s1 + $0x38] sm:$0xff]
  %v37 = vld [vmem:[%s1 + $0x40] sm:$0xff]
  %v38 = vld [vmem:[%s1 + $0x48] sm:$0xff]
  %v39 = vld [vmem:[%s1 + $0x50] sm:$0xff]
  %v40 = vld [vmem:[%s1 + $0x58] sm:$0xff]
  %v41 = vld [vmem:[%s1 + $0x60] sm:$0xff]
  %v42 = vld [vmem:[%s1 + $0x68] sm:$0xff]
  %v43 = vld [vmem:[%s1 + $0x70] sm:$0xff]
  %v44 = vld [vmem:[%s1 + $0x78] sm:$0xff]
  %v45 = vld [vmem:[%s1 + $0x80] sm:$0xff]
  %v46 = vld [vmem:[%s1 + $0x88] sm:$0xff]
  %v47 = vld [vmem:[%s1 + $0x90] sm:$0xff]
  %v48 = vld [vmem:[%s1 + $0x98] sm:$0xff]
  %v49 = vld [vmem:[%s1 + $0xa0] sm:$0xff]
  %v50 = vld [vmem:[%s1 + $0xa8] sm:$0xff]
  %v51 = vld [vmem:[%s1 + $0xb0] sm:$0xff]
  %v52 = vld [vmem:[%s1 + $0xb8] sm:$0xff]
  %v53 = vld [vmem:[%s1 + $0xc0] sm:$0xff]
  %v54 = vld [vmem:[%s1 + $0xc8] sm:$0xff]
  %v55 = vld [vmem:[%s1 + $0xd0] sm:$0xff]
  %v56 = vld [vmem:[%s1 + $0xd8] sm:$0xff]
  %v57 = vld [vmem:[%s1 + $0xe0] sm:$0xff]
  %v58 = vld [vmem:[%s1 + $0xe8] sm:$0xff]
  %v59 = vld [vmem:[%s1 + $0xf0] sm:$0xff]
  %v60 = vld [vmem:[%s1 + $0xf8] sm:$0xff]
  %v61 = vld [vmem:[%s1 + $0x100] sm:$0xff]
  %v62 = vld [vmem:[%s1 + $0x108] sm:$0xff]
  %v63 = vld [vmem:[%s1 + $0x110] sm:$0xff]
  %v64 = vld [vmem:[%s1 + $0x118] sm:$0xff]
  %v65 = vld [vmem:[%s1 + $0x120] sm:$0xff]
  %v66 = vld [vmem:[%s1 + $0x128] sm:$0xff]
  %v67 = vld [vmem:[%s1 + $0x130] sm:$0xff]
  %v68 = vld [vmem:[%s1 + $0x138] sm:$0xff]
  %v69 = vld [vmem:[%s1 + $0x140] sm:$0xff]
  %v70 = vld [vmem:[%s1 + $0x148] sm:$0xff]
  %v71 = vld [vmem:[%s1 + $0x150] sm:$0xff]
  %v72 = vld [vmem:[%s1 + $0x158] sm:$0xff]
  %v73 = vld [vmem:[%s1 + $0x160] sm:$0xff]
  %v74 = vld [vmem:[%s1 + $0x168] sm:$0xff]
  %v75 = vld [vmem:[%s1 + $0x170] sm:$0xff]
  %v76 = vld [vmem:[%s1 + $0x178] sm:$0xff]
  %v77 = vld [vmem:[%s1 + $0x180] sm:$0xff]
  %v78 = vld [vmem:[%s1 + $0x188] sm:$0xff]
  %v79 = vld [vmem:[%s1 + $0x190] sm:$0xff]
  %v80 = vld [vmem:[%s1 + $0x198] sm:$0xff]
  %v81 = vld [vmem:[%s1 + $0x1a0] sm:$0xff]
  %v82 = vld [vmem:[%s1 + $0x1a8] sm:$0xff]
  %v83 = vld [vmem:[%s1 + $0x1b0] sm:$0xff]
  %v84 = vld [vmem:[%s1 + $0x1b8] sm:$0xff]
  %v85 = vld [vmem:[%s1 + $0x1c0] sm:$0xff]
  %v86 = vld [vmem:[%s1 + $0x1c8] sm:$0xff]
  %v87 = vld [vmem:[%s1 + $0x1d0] sm:$0xff]
  %v88 = vld [vmem:[%s1 + $0x1d8] sm:$0xff]
  %v89 = vld [vmem:[%s1 + $0x1e0] sm:$0xff]
  %v90 = vld [vmem:[%s1 + $0x1e8] sm:$0xff]
  %v91 = vld [vmem:[%s1 + $0x1f0] sm:$0xff]
  %v92 = vld [vmem:[%s1 + $0x1f8] sm:$0xff]
  %v93 = vld [vmem:[%s1 + $0x200] sm:$0xff]
  %v94 = vld [vmem:[%s1 + $0x208] sm:$0xff]
  %v95 = vld [vmem:[%s1 + $0x210] sm:$0xff]
  %v96 = vld [vmem:[%s1 + $0x218] sm:$0xff]
  %v97 = vld [vmem:[%s1 + $0x220] sm:$0xff]
  %v98 = vld [vmem:[%s1 + $0x228] sm:$0xff]
  %v99 = vld [vmem:[%s1 + $0x230] sm:$0xff]
  %v100 = vld [vmem:[%s1 + $0x238] sm:$0xff]
  %v101 = vld [vmem:[%s1 + $0x240] sm:$0xff]
  %v102 = vld [vmem:[%s1 + $0x248] sm:$0xff]
  %v103 = vld [vmem:[%s1 + $0x250] sm:$0xff]
  %v104 = vld [vmem:[%s1 + $0x258] sm:$0xff]
  %v105 = vld [vmem:[%s1 + $0x260] sm:$0xff]
  %v106 = vld [vmem:[%s1 + $0x268] sm:$0xff]
  %v107 = vld [vmem:[%s1 + $0x270] sm:$0xff]
  %v108 = vld [vmem:[%s1 + $0x278] sm:$0xff]
  %v109 = vld [vmem:[%s1 + $0x280] sm:$0xff]
  %v110 = vld [vmem:[%s1 + $0x288] sm:$0xff]
  %v111 = vld [vmem:[%s1 + $0x290] sm:$0xff]
  %v112 = vld [vmem:[%s1 + $0x298] sm:$0xff]
  %v113 = vld [vmem:[%s1 + $0x2a0] sm:$0xff]
  %v114 = vld [vmem:[%s1 + $0x2a8] sm:$0xff]
  %v115 = vld [vmem:[%s1 + $0x2b0] sm:$0xff]
  %v116 = vld [vmem:[%s1 + $0x2b8] sm:$0xff]
  %v117 = vld [vmem:[%s1 + $0x2c0] sm:$0xff]
  %v118 = vld [vmem:[%s1 + $0x2c8] sm:$0xff]
  %v119 = vld [vmem:[%s1 + $0x2d0] sm:$0xff]
  %v120 = vld [vmem:[%s1 + $0x2d8] sm:$0xff]
  %v121 = vld [vmem:[%s1 + $0x2e0] sm:$0xff]
  %v122 = vld [vmem:[%s1 + $0x2e8] sm:$0xff]
  %v123 = vld [vmem:[%s1 + $0x2f0] sm:$0xff]
  %v124 = vld [vmem:[%s1 + $0x2f8] sm:$0xff]
  %v125 = vld [vmem:[%s1 + $0x300] sm:$0xff]
  %v126 = vld [vmem:[%s1 + $0x308] sm:$0xff]
  %v127 = vld [vmem:[%s1 + $0x310] sm:$0xff]
  %v128 = vld [vmem:[%s1 + $0x318] sm:$0xff]
  %v129 = vld [vmem:[%s1 + $0x320] sm:$0xff]
  %v130 = vld [vmem:[%s1 + $0x328] sm:$0xff]
  %v131 = vld [vmem:[%s1 + $0x330] sm:$0xff]
  %v132 = vld [vmem:[%s1 + $0x338] sm:$0xff]
  %v133 = vld [vmem:[%s1 + $0x340] sm:$0xff]
  %v134 = vld [vmem:[%s1 + $0x348] sm:$0xff]
  %v135 = vld [vmem:[%s1 + $0x350] sm:$0xff]
  %v136 = vld [vmem:[%s1 + $0x358] sm:$0xff]
  %v137 = vld [vmem:[%s1 + $0x360] sm:$0xff]
  %v138 = vld [vmem:[%s1 + $0x368] sm:$0xff]
  %v139 = vld [vmem:[%s1 + $0x370] sm:$0xff]
  %v140 = vld [vmem:[%s1 + $0x378] sm:$0xff]
  %v141 = vld [vmem:[%s1 + $0x380] sm:$0xff]
  %v142 = vld [vmem:[%s1 + $0x388] sm:$0xff]
  %v143 = vld [vmem:[%s1 + $0x390] sm:$0xff]
  %v144 = vld [vmem:[%s1 + $0x398] sm:$0xff]
  %v145 = vld [vmem:[%s1 + $0x3a0] sm:$0xff]
  %v146 = vld [vmem:[%s1 + $0x3a8] sm:$0xff]
  %v147 = vld [vmem:[%s1 + $0x3b0] sm:$0xff]
  %v148 = vld [vmem:[%s1 + $0x3b8] sm:$0xff]
  %v149 = vld [vmem:[%s1 + $0x3c0] sm:$0xff]
  %v150 = vld [vmem:[%s1 + $0x3c8] sm:$0xff]
  %v151 = vld [vmem:[%s1 + $0x3d0] sm:$0xff]
  %v152 = vld [vmem:[%s1 + $0x3d8] sm:$0xff]
  %v153 = vld [vmem:[%s1 + $0x3e0] sm:$0xff]
  %v154 = vld [vmem:[%s1 + $0x3e8] sm:$0xff]
  %v155 = vld [vmem:[%s1 + $0x3f0] sm:$0xff]
  %v156 = vld [vmem:[%s1 + $0x3f8] sm:$0xff]
  %v157 = vld [vmem:[%s1 + $0x400] sm:$0xff]
  %v158 = vld [vmem:[%s1 + $0x408] sm:$0xff]
  %v159 = vld [vmem:[%s1 + $0x410] sm:$0xff]
  %v160 = vld [vmem:[%s1 + $0x418] sm:$0xff]
  %v161 = vld [vmem:[%s1 + $0x420] sm:$0xff]
  %v162 = vld [vmem:[%s1 + $0x428] sm:$0xff]
  %v163 = vld [vmem:[%s1 + $0x430] sm:$0xff]
  %v164 = vld [vmem:[%s1 + $0x438] sm:$0xff]
  %v165 = vld [vmem:[%s1 + $0x440] sm:$0xff]
  %v166 = vld [vmem:[%s1 + $0x448] sm:$0xff]
  %v167 = vld [vmem:[%s1 + $0x450] sm:$0xff]
  %v168 = vld [vmem:[%s1 + $0x458] sm:$0xff]
  %v169 = vld [vmem:[%s1 + $0x460] sm:$0xff]
  %v170 = vld [vmem:[%s1 + $0x468] sm:$0xff]
  %v171 = vld [vmem:[%s1 + $0x470] sm:$0xff]
  %v172 = vld [vmem:[%s1 + $0x478] sm:$0xff]
  %v173 = vld [vmem:[%s1 + $0x480] sm:$0xff]
  %v174 = vld [vmem:[%s1 + $0x488] sm:$0xff]
  %v175 = vld [vmem:[%s1 + $0x490] sm:$0xff]
  %v176 = vld [vmem:[%s1 + $0x498] sm:$0xff]
  %v177 = vld [vmem:[%s1 + $0x4a0] sm:$0xff]
  %v178 = vld [vmem:[%s1 + $0x4a8] sm:$0xff]
  %v179 = vld [vmem:[%s1 + $0x4b0] sm:$0xff]
  %v180 = vld [vmem:[%s1 + $0x4b8] sm:$0xff]
  %v181 = vld [vmem:[%s1 + $0x4c0] sm:$0xff]
  %v182 = vld [vmem:[%s1 + $0x4c8] sm:$0xff]
  %v183 = vld [vmem:[%s1 + $0x4d0] sm:$0xff]
  %v184 = vld [vmem:[%s1 + $0x4d8] sm:$0xff]
  %v185 = vld [vmem:[%s1 + $0x4e0] sm:$0xff]
  %v186 = vld [vmem:[%s1 + $0x4e8] sm:$0xff]
  %v187 = vld [vmem:[%s1 + $0x4f0] sm:$0xff]
  %v188 = vld [vmem:[%s1 + $0x4f8] sm:$0xff]
  %v189 = vld [vmem:[%s1 + $0x500] sm:$0xff]
  %v190 = vld [vmem:[%s1 + $0x508] sm:$0xff]
  %v191 = vld [vmem:[%s1 + $0x510] sm:$0xff]
  %v192 = vld [vmem:[%s1 + $0x518] sm:$0xff]
  %v193 = vld [vmem:[%s1 + $0x520] sm:$0xff]
  %v194 = vld [vmem:[%s1 + $0x528] sm:$0xff]
  %v195 = vld [vmem:[%s1 + $0x530] sm:$0xff]
  %v196 = vld [vmem:[%s1 + $0x538] sm:$0xff]
  %v197 = vld [vmem:[%s1 + $0x540] sm:$0xff]
  %v198 = vld [vmem:[%s1 + $0x548] sm:$0xff]
  %v199 = vld [vmem:[%s1 + $0x550] sm:$0xff]
  %v200 = vld [vmem:[%s1 + $0x558] sm:$0xff]
  %v201 = vld [vmem:[%s1 + $0x560] sm:$0xff]
  %v202 = vld [vmem:[%s1 + $0x568] sm:$0xff]
  %v203 = vld [vmem:[%s1 + $0x570] sm:$0xff]
  %v204 = vld [vmem:[%s1 + $0x578] sm:$0xff]
  %v205 = vld [vmem:[%s1 + $0x580] sm:$0xff]
  %v206 = vld [vmem:[%s1 + $0x588] sm:$0xff]
  %v207 = vld [vmem:[%s1 + $0x590] sm:$0xff]
  %v208 = vld [vmem:[%s1 + $0x598] sm:$0xff]
  %v209 = vld [vmem:[%s1 + $0x5a0] sm:$0xff]
  %v210 = vld [vmem:[%s1 + $0x5a8] sm:$0xff]
  %v211 = vld [vmem:[%s1 + $0x5b0] sm:$0xff]
  %v212 = vld [vmem:[%s1 + $0x5b8] sm:$0xff]
  %v213 = vld [vmem:[%s1 + $0x5c0] sm:$0xff]
  %v214 = vld [vmem:[%s1 + $0x5c8] sm:$0xff]
  %v215 = vld [vmem:[%s1 + $0x5d0] sm:$0xff]
  %v216 = vld [vmem:[%s1 + $0x5d8] sm:$0xff]
  %v217 = vld [vmem:[%s1 + $0x5e0] sm:$0xff]
  %v218 = vld [vmem:[%s1 + $0x5e8] sm:$0xff]
  %v219 = vld [vmem:[%s1 + $0x5f0] sm:$0xff]
  %v220 = vld [vmem:[%s1 + $0x5f8] sm:$0xff]
  %v221 = vld [vmem:[%s1 + $0x600] sm:$0xff]
  %v222 = vld [vmem:[%s1 + $0x608] sm:$0xff]
  %v223 = vld [vmem:[%s1 + $0x610] sm:$0xff]
  %v224 = vld [vmem:[%s1 + $0x618] sm:$0xff]
  %v225 = vld [vmem:[%s1 + $0x620] sm:$0xff]
  %v226 = vld [vmem:[%s1 + $0x628] sm:$0xff]
  %v227 = vld [vmem:[%s1 + $0x630] sm:$0xff]
  %v228 = vld [vmem:[%s1 + $0x638] sm:$0xff]
  %v229 = vld [vmem:[%s1 + $0x640] sm:$0xff]
  %v230 = vld [vmem:[%s1 + $0x648] sm:$0xff]
  %v231 = vld [vmem:[%s1 + $0x650] sm:$0xff]
  %v232 = vld [vmem:[%s1 + $0x658] sm:$0xff]
  %v233 = vld [vmem:[%s1 + $0x660] sm:$0xff]
  %v234 = vld [vmem:[%s1 + $0x668] sm:$0xff]
  %v235 = vld [vmem:[%s1 + $0x670] sm:$0xff]
  %v236 = vld [vmem:[%s1 + $0x678] sm:$0xff]
  %v237 = vld [vmem:[%s1 + $0x680] sm:$0xff]
  %v238 = vld [vmem:[%s1 + $0x688] sm:$0xff]
  %v239 = vld [vmem:[%s1 + $0x690] sm:$0xff]
  %v240 = vld [vmem:[%s1 + $0x698] sm:$0xff]
  %v241 = vld [vmem:[%s1 + $0x6a0] sm:$0xff]
  %v242 = vld [vmem:[%s1 + $0x6a8] sm:$0xff]
  %v243 = vld [vmem:[%s1 + $0x6b0] sm:$0xff]
  %v244 = vld [vmem:[%s1 + $0x6b8] sm:$0xff]
  %v245 = vld [vmem:[%s1 + $0x6c0] sm:$0xff]
  %v246 = vld [vmem:[%s1 + $0x6c8] sm:$0xff]
  %v247 = vld [vmem:[%s1 + $0x6d0] sm:$0xff]
  %v248 = vld [vmem:[%s1 + $0x6d8] sm:$0xff]
  %v249 = vld [vmem:[%s1 + $0x6e0] sm:$0xff]
  %v250 = vld [vmem:[%s1 + $0x6e8] sm:$0xff]
  %v251 = vld [vmem:[%s1 + $0x6f0] sm:$0xff]
  %v252 = vld [vmem:[%s1 + $0x6f8] sm:$0xff]
  %v253 = vld [vmem:[%s1 + $0x700] sm:$0xff]
  %v254 = vld [vmem:[%s1 + $0x708] sm:$0xff]
  %v255 = vld [vmem:[%s1 + $0x710] sm:$0xff]
  %v256 = vld [vmem:[%s1 + $0x718] sm:$0xff]
  %v257 = vld [vmem:[%s1 + $0x720] sm:$0xff]
  %v258 = vld [vmem:[%s1 + $0x728] sm:$0xff]
  %v259 = vld [vmem:[%s1 + $0x730] sm:$0xff]
  %v260 = vld [vmem:[%s1 + $0x738] sm:$0xff]
  %v261 = vld [vmem:[%s1 + $0x740] sm:$0xff]
  %v262 = vld [vmem:[%s1 + $0x748] sm:$0xff]
  %v263 = vld [vmem:[%s1 + $0x750] sm:$0xff]
  %v264 = vld [vmem:[%s1 + $0x758] sm:$0xff]
  %v265 = vld [vmem:[%s1 + $0x760] sm:$0xff]
  %v266 = vld [vmem:[%s1 + $0x768] sm:$0xff]
  %v267 = vld [vmem:[%s1 + $0x770] sm:$0xff]
  %v268 = vld [vmem:[%s1 + $0x778] sm:$0xff]
  %v269 = vld [vmem:[%s1 + $0x780] sm:$0xff]
  %v270 = vld [vmem:[%s1 + $0x788] sm:$0xff]
  %v271 = vld [vmem:[%s1 + $0x790] sm:$0xff]
  %v272 = vld [vmem:[%s1 + $0x798] sm:$0xff]
  %v273 = vld [vmem:[%s1 + $0x7a0] sm:$0xff]
  %v274 = vld [vmem:[%s1 + $0x7a8] sm:$0xff]
  %v275 = vld [vmem:[%s1 + $0x7b0] sm:$0xff]
  %v276 = vld [vmem:[%s1 + $0x7b8] sm:$0xff]
  %v277 = vld [vmem:[%s1 + $0x7c0] sm:$0xff]
  %v278 = vld [vmem:[%s1 + $0x7c8] sm:$0xff]
  %v279 = vld [vmem:[%s1 + $0x7d0] sm:$0xff]
  %v280 = vld [vmem:[%s1 + $0x7d8] sm:$0xff]
  %v281 = vld [vmem:[%s1 + $0x7e0] sm:$0xff]
  %v282 = vld [vmem:[%s1 + $0x7e8] sm:$0xff]
  %v283 = vld [vmem:[%s1 + $0x7f0] sm:$0xff]
  %v284 = vld [vmem:[%s1 + $0x7f8] sm:$0xff]
  %v285 = vld [vmem:[%s1 + $0x800] sm:$0xff]
  %v286 = vld [vmem:[%s1 + $0x808] sm:$0xff]
  %v287 = vld [vmem:[%s1 + $0x810] sm:$0xff]
  %v288 = vld [vmem:[%s1 + $0x818] sm:$0xff]
  %v289 = vld [vmem:[%s1 + $0x820] sm:$0xff]
  %v290 = vld [vmem:[%s1 + $0x828] sm:$0xff]
  %v291 = vld [vmem:[%s1 + $0x830] sm:$0xff]
  %v292 = vld [vmem:[%s1 + $0x838] sm:$0xff]
  %v293 = vld [vmem:[%s1 + $0x840] sm:$0xff]
  %v294 = vld [vmem:[%s1 + $0x848] sm:$0xff]
  %v295 = vld [vmem:[%s1 + $0x850] sm:$0xff]
  %v296 = vld [vmem:[%s1 + $0x858] sm:$0xff]
  %v297 = vld [vmem:[%s1 + $0x860] sm:$0xff]
  %v298 = vld [vmem:[%s1 + $0x868] sm:$0xff]
  %v299 = vld [vmem:[%s1 + $0x870] sm:$0xff]
  %v300 = vld [vmem:[%s1 + $0x878] sm:$0xff]
  %v301 = vld [vmem:[%s1 + $0x880] sm:$0xff]
  %v302 = vld [vmem:[%s1 + $0x888] sm:$0xff]
  %v303 = vld [vmem:[%s1 + $0x890] sm:$0xff]
  %v304 = vld [vmem:[%s1 + $0x898] sm:$0xff]
  %v305 = vld [vmem:[%s1 + $0x8a0] sm:$0xff]
  %v306 = vld [vmem:[%s1 + $0x8a8] sm:$0xff]
  %v307 = vld [vmem:[%s1 + $0x8b0] sm:$0xff]
  %v308 = vld [vmem:[%s1 + $0x8b8] sm:$0xff]
  %v309 = vld [vmem:[%s1 + $0x8c0] sm:$0xff]
  %v310 = vld [vmem:[%s1 + $0x8c8] sm:$0xff]
  %v311 = vld [vmem:[%s1 + $0x8d0] sm:$0xff]
  %v312 = vld [vmem:[%s1 + $0x8d8] sm:$0xff]
  %v313 = vld [vmem:[%s1 + $0x8e0] sm:$0xff]
  %v314 = vld [vmem:[%s1 + $0x8e8] sm:$0xff]
  %v315 = vld [vmem:[%s1 + $0x8f0] sm:$0xff]
  %v316 = vld [vmem:[%s1 + $0x8f8] sm:$0xff]
  %v317 = vld [vmem:[%s2] sm:$0x3]
  %v319 = vlaneseq
  %v320 = vshrl.u32 %v319, 7
  %v321 = vsub.s32 0, %v320
  %v322 = vrot.slane %v317, %v321
  %v323 = vlaneseq
  %v324 = vshrl.u32 %v323, 7
  %v325 = vsub.s32 1, %v324
  %v326 = vrot.slane %v317, %v325
  %329 = vmatprep.subr.mxu0 %v30
  %330 = vmatpush1.msra.mxu0 %v29
  %331 = vmatprep.subr.mxu0 %v32
  %332 = vmatpush1.msra.mxu0 %v31
  %333 = vmatprep.subr.mxu0 %v34
  %334 = vmatpush1.msra.mxu0 %v33
  %335 = vmatprep.subr.mxu0 %v36
  %336 = vmatpush1.msra.mxu0 %v35
  %337 = vmatprep.subr.mxu0 %v38
  %338 = vmatpush1.msra.mxu0 %v37
  %339 = vmatprep.subr.mxu0 %v40
  %340 = vmatpush1.msra.mxu0 %v39
  %341 = vmatprep.subr.mxu0 %v42
  %342 = vmatpush1.msra.mxu0 %v41
  %343 = vmatprep.subr.mxu0 %v44
  %344 = vmatpush1.msra.mxu0 %v43
  %345 = vmatprep.subr.mxu0 %v46
  %346 = vmatpush1.msra.mxu0 %v45
  %347 = vmatprep.subr.mxu0 %v48
  %348 = vmatpush1.msra.mxu0 %v47
  %349 = vmatprep.subr.mxu0 %v50
  %350 = vmatpush1.msra.mxu0 %v49
  %351 = vmatprep.subr.mxu0 %v52
  %352 = vmatpush1.msra.mxu0 %v51
  %353 = vmatprep.subr.mxu0 %v54
  %354 = vmatpush1.msra.mxu0 %v53
  %355 = vmatprep.subr.mxu0 %v56
  %356 = vmatpush1.msra.mxu0 %v55
  %357 = vmatprep.subr.mxu0 %v58
  %358 = vmatpush1.msra.mxu0 %v57
  %359 = vmatprep.subr.mxu0 %v60
  %360 = vmatpush1.msra.mxu0 %v59
  %361 = vmatprep.subr.mxu0 %v62
  %362 = vmatpush1.msra.mxu0 %v61
  %363 = vmatprep.subr.mxu0 %v64
  %364 = vmatpush1.msra.mxu0 %v63
  %365 = vmatprep.subr.mxu0 %v66
  %366 = vmatpush1.msra.mxu0 %v65
  %367 = vmatprep.subr.mxu0 %v68
  %368 = vmatpush1.msra.mxu0 %v67
  %369 = vmatprep.subr.mxu0 %v70
  %370 = vmatpush1.msra.mxu0 %v69
  %371 = vmatprep.subr.mxu0 %v72
  %372 = vmatpush1.msra.mxu0 %v71
  %373 = vmatprep.subr.mxu0 %v74
  %374 = vmatpush1.msra.mxu0 %v73
  %375 = vmatprep.subr.mxu0 %v76
  %376 = vmatpush1.msra.mxu0 %v75
  %377 = vmatprep.subr.mxu0 %v78
  %378 = vmatpush1.msra.mxu0 %v77
  %379 = vmatprep.subr.mxu0 %v80
  %380 = vmatpush1.msra.mxu0 %v79
  %381 = vmatprep.subr.mxu0 %v82
  %382 = vmatpush1.msra.mxu0 %v81
  %383 = vmatprep.subr.mxu0 %v84
  %384 = vmatpush1.msra.mxu0 %v83
  %385 = vmatprep.subr.mxu0 %v86
  %386 = vmatpush1.msra.mxu0 %v85
  %387 = vmatprep.subr.mxu0 %v88
  %388 = vmatpush1.msra.mxu0 %v87
  %389 = vmatprep.subr.mxu0 %v90
  %390 = vmatpush1.msra.mxu0 %v89
  %391 = vmatprep.subr.mxu0 %v92
  %392 = vmatpush1.msra.mxu0 %v91
  %393 = vmatprep.mubr.f32.mxu0 %v21
  %394 = vmatmul.mubr.f32.gmra.mrb[0].mxu0 %v20
  %v395 = vpop.f32.mrb[0].mxu0
  %v396 = vadd.f32 %v322, %v395
  %v397 = vpop.f32.mrb[0].mxu0
  %v398 = vadd.f32 %v326, %v397
  %399 = vdwg.mxu0
  %400 = vmatprep.subr.mxu0 %v94
  %401 = vmatpush1.msra.mxu0 %v93
  %402 = vmatprep.subr.mxu0 %v96
  %403 = vmatpush1.msra.mxu0 %v95
  %404 = vmatprep.subr.mxu0 %v98
  %405 = vmatpush1.msra.mxu0 %v97
  %406 = vmatprep.subr.mxu0 %v100
  %407 = vmatpush1.msra.mxu0 %v99
  %408 = vmatprep.subr.mxu0 %v102
  %409 = vmatpush1.msra.mxu0 %v101
  %410 = vmatprep.subr.mxu0 %v104
  %411 = vmatpush1.msra.mxu0 %v103
  %412 = vmatprep.subr.mxu0 %v106
  %413 = vmatpush1.msra.mxu0 %v105
  %414 = vmatprep.subr.mxu0 %v108
  %415 = vmatpush1.msra.mxu0 %v107
  %416 = vmatprep.subr.mxu0 %v110
  %417 = vmatpush1.msra.mxu0 %v109
  %418 = vmatprep.subr.mxu0 %v112
  %419 = vmatpush1.msra.mxu0 %v111
  %420 = vmatprep.subr.mxu0 %v114
  %421 = vmatpush1.msra.mxu0 %v113
  %422 = vmatprep.subr.mxu0 %v116
  %423 = vmatpush1.msra.mxu0 %v115
  %424 = vmatprep.subr.mxu0 %v118
  %425 = vmatpush1.msra.mxu0 %v117
  %426 = vmatprep.subr.mxu0 %v120
  %427 = vmatpush1.msra.mxu0 %v119
  %428 = vmatprep.subr.mxu0 %v122
  %429 = vmatpush1.msra.mxu0 %v121
  %430 = vmatprep.subr.mxu0 %v124
  %431 = vmatpush1.msra.mxu0 %v123
  %432 = vmatprep.subr.mxu0 %v126
  %433 = vmatpush1.msra.mxu0 %v125
  %434 = vmatprep.subr.mxu0 %v128
  %435 = vmatpush1.msra.mxu0 %v127
  %436 = vmatprep.subr.mxu0 %v130
  %437 = vmatpush1.msra.mxu0 %v129
  %438 = vmatprep.subr.mxu0 %v132
  %439 = vmatpush1.msra.mxu0 %v131
  %440 = vmatprep.subr.mxu0 %v134
  %441 = vmatpush1.msra.mxu0 %v133
  %442 = vmatprep.subr.mxu0 %v136
  %443 = vmatpush1.msra.mxu0 %v135
  %444 = vmatprep.subr.mxu0 %v138
  %445 = vmatpush1.msra.mxu0 %v137
  %446 = vmatprep.subr.mxu0 %v140
  %447 = vmatpush1.msra.mxu0 %v139
  %448 = vmatprep.subr.mxu0 %v142
  %449 = vmatpush1.msra.mxu0 %v141
  %450 = vmatprep.subr.mxu0 %v144
  %451 = vmatpush1.msra.mxu0 %v143
  %452 = vmatprep.subr.mxu0 %v146
  %453 = vmatpush1.msra.mxu0 %v145
  %454 = vmatprep.subr.mxu0 %v148
  %455 = vmatpush1.msra.mxu0 %v147
  %456 = vmatprep.subr.mxu0 %v150
  %457 = vmatpush1.msra.mxu0 %v149
  %458 = vmatprep.subr.mxu0 %v152
  %459 = vmatpush1.msra.mxu0 %v151
  %460 = vmatprep.subr.mxu0 %v154
  %461 = vmatpush1.msra.mxu0 %v153
  %462 = vmatprep.subr.mxu0 %v156
  %463 = vmatpush1.msra.mxu0 %v155
  %464 = vmatprep.mubr.f32.mxu0 %v23
  %465 = vmatmul.mubr.f32.gmra.mrb[0].mxu0 %v22
  %v466 = vpop.f32.mrb[0].mxu0
  %v467 = vadd.f32 %v396, %v466
  %v468 = vpop.f32.mrb[0].mxu0
  %v469 = vadd.f32 %v398, %v468
  %470 = vdwg.mxu0
  %471 = vmatprep.subr.mxu0 %v158
  %472 = vmatpush1.msra.mxu0 %v157
  %473 = vmatprep.subr.mxu0 %v160
  %474 = vmatpush1.msra.mxu0 %v159
  %475 = vmatprep.subr.mxu0 %v162
  %476 = vmatpush1.msra.mxu0 %v161
  %477 = vmatprep.subr.mxu0 %v164
  %478 = vmatpush1.msra.mxu0 %v163
  %479 = vmatprep.subr.mxu0 %v166
  %480 = vmatpush1.msra.mxu0 %v165
  %481 = vmatprep.subr.mxu0 %v168
  %482 = vmatpush1.msra.mxu0 %v167
  %483 = vmatprep.subr.mxu0 %v170
  %484 = vmatpush1.msra.mxu0 %v169
  %485 = vmatprep.subr.mxu0 %v172
  %486 = vmatpush1.msra.mxu0 %v171
  %487 = vmatprep.subr.mxu0 %v174
  %488 = vmatpush1.msra.mxu0 %v173
  %489 = vmatprep.subr.mxu0 %v176
  %490 = vmatpush1.msra.mxu0 %v175
  %491 = vmatprep.subr.mxu0 %v178
  %492 = vmatpush1.msra.mxu0 %v177
  %493 = vmatprep.subr.mxu0 %v180
  %494 = vmatpush1.msra.mxu0 %v179
  %495 = vmatprep.subr.mxu0 %v182
  %496 = vmatpush1.msra.mxu0 %v181
  %497 = vmatprep.subr.mxu0 %v184
  %498 = vmatpush1.msra.mxu0 %v183
  %499 = vmatprep.subr.mxu0 %v186
  %500 = vmatpush1.msra.mxu0 %v185
  %501 = vmatprep.subr.mxu0 %v188
  %502 = vmatpush1.msra.mxu0 %v187
  %503 = vmatprep.subr.mxu0 %v190
  %504 = vmatpush1.msra.mxu0 %v189
  %505 = vmatprep.subr.mxu0 %v192
  %506 = vmatpush1.msra.mxu0 %v191
  %507 = vmatprep.subr.mxu0 %v194
  %508 = vmatpush1.msra.mxu0 %v193
  %509 = vmatprep.subr.mxu0 %v196
  %510 = vmatpush1.msra.mxu0 %v195
  %511 = vmatprep.subr.mxu0 %v198
  %512 = vmatpush1.msra.mxu0 %v197
  %513 = vmatprep.subr.mxu0 %v200
  %514 = vmatpush1.msra.mxu0 %v199
  %515 = vmatprep.subr.mxu0 %v202
  %516 = vmatpush1.msra.mxu0 %v201
  %517 = vmatprep.subr.mxu0 %v204
  %518 = vmatpush1.msra.mxu0 %v203
  %519 = vmatprep.subr.mxu0 %v206
  %520 = vmatpush1.msra.mxu0 %v205
  %521 = vmatprep.subr.mxu0 %v208
  %522 = vmatpush1.msra.mxu0 %v207
  %523 = vmatprep.subr.mxu0 %v210
  %524 = vmatpush1.msra.mxu0 %v209
  %525 = vmatprep.subr.mxu0 %v212
  %526 = vmatpush1.msra.mxu0 %v211
  %527 = vmatprep.subr.mxu0 %v214
  %528 = vmatpush1.msra.mxu0 %v213
  %529 = vmatprep.subr.mxu0 %v216
  %530 = vmatpush1.msra.mxu0 %v215
  %531 = vmatprep.subr.mxu0 %v218
  %532 = vmatpush1.msra.mxu0 %v217
  %533 = vmatprep.subr.mxu0 %v220
  %534 = vmatpush1.msra.mxu0 %v219
  %535 = vmatprep.mubr.f32.mxu0 %v25
  %536 = vmatmul.mubr.f32.gmra.mrb[0].mxu0 %v24
  %v537 = vpop.f32.mrb[0].mxu0
  %v538 = vadd.f32 %v467, %v537
  %v539 = vpop.f32.mrb[0].mxu0
  %v540 = vadd.f32 %v469, %v539
  %541 = vdwg.mxu0
  %542 = vmatprep.subr.mxu0 %v222
  %543 = vmatpush1.msra.mxu0 %v221
  %544 = vmatprep.subr.mxu0 %v224
  %545 = vmatpush1.msra.mxu0 %v223
  %546 = vmatprep.subr.mxu0 %v226
  %547 = vmatpush1.msra.mxu0 %v225
  %548 = vmatprep.subr.mxu0 %v228
  %549 = vmatpush1.msra.mxu0 %v227
  %550 = vmatprep.subr.mxu0 %v230
  %551 = vmatpush1.msra.mxu0 %v229
  %552 = vmatprep.subr.mxu0 %v232
  %553 = vmatpush1.msra.mxu0 %v231
  %554 = vmatprep.subr.mxu0 %v234
  %555 = vmatpush1.msra.mxu0 %v233
  %556 = vmatprep.subr.mxu0 %v236
  %557 = vmatpush1.msra.mxu0 %v235
  %558 = vmatprep.subr.mxu0 %v238
  %559 = vmatpush1.msra.mxu0 %v237
  %560 = vmatprep.subr.mxu0 %v240
  %561 = vmatpush1.msra.mxu0 %v239
  %562 = vmatprep.subr.mxu0 %v242
  %563 = vmatpush1.msra.mxu0 %v241
  %564 = vmatprep.subr.mxu0 %v244
  %565 = vmatpush1.msra.mxu0 %v243
  %566 = vmatprep.subr.mxu0 %v246
  %567 = vmatpush1.msra.mxu0 %v245
  %568 = vmatprep.subr.mxu0 %v248
  %569 = vmatpush1.msra.mxu0 %v247
  %570 = vmatprep.subr.mxu0 %v250
  %571 = vmatpush1.msra.mxu0 %v249
  %572 = vmatprep.subr.mxu0 %v252
  %573 = vmatpush1.msra.mxu0 %v251
  %574 = vmatprep.subr.mxu0 %v254
  %575 = vmatpush1.msra.mxu0 %v253
  %576 = vmatprep.subr.mxu0 %v256
  %577 = vmatpush1.msra.mxu0 %v255
  %578 = vmatprep.subr.mxu0 %v258
  %579 = vmatpush1.msra.mxu0 %v257
  %580 = vmatprep.subr.mxu0 %v260
  %581 = vmatpush1.msra.mxu0 %v259
  %582 = vmatprep.subr.mxu0 %v262
  %583 = vmatpush1.msra.mxu0 %v261
  %584 = vmatprep.subr.mxu0 %v264
  %585 = vmatpush1.msra.mxu0 %v263
  %586 = vmatprep.subr.mxu0 %v266
  %587 = vmatpush1.msra.mxu0 %v265
  %588 = vmatprep.subr.mxu0 %v268
  %589 = vmatpush1.msra.mxu0 %v267
  %590 = vmatprep.subr.mxu0 %v270
  %591 = vmatpush1.msra.mxu0 %v269
  %592 = vmatprep.subr.mxu0 %v272
  %593 = vmatpush1.msra.mxu0 %v271
  %594 = vmatprep.subr.mxu0 %v274
  %595 = vmatpush1.msra.mxu0 %v273
  %596 = vmatprep.subr.mxu0 %v276
  %597 = vmatpush1.msra.mxu0 %v275
  %598 = vmatprep.subr.mxu0 %v278
  %599 = vmatpush1.msra.mxu0 %v277
  %600 = vmatprep.subr.mxu0 %v280
  %601 = vmatpush1.msra.mxu0 %v279
  %602 = vmatprep.subr.mxu0 %v282
  %603 = vmatpush1.msra.mxu0 %v281
  %604 = vmatprep.subr.mxu0 %v284
  %605 = vmatpush1.msra.mxu0 %v283
  %606 = vmatprep.mubr.f32.mxu0 %v27
  %607 = vmatmul.mubr.f32.gmra.mrb[0].mxu0 %v26
  %v608 = vpop.f32.mrb[0].mxu0
  %v609 = vadd.f32 %v538, %v608
  %v610 = vpop.f32.mrb[0].mxu0
  %v611 = vadd.f32 %v540, %v610
  %612 = vdwg.mxu0
  %613 = vmatprep.subr.mxu0 %v286
  %614 = vmatpush1.msra.mxu0 %v285
  %615 = vmatprep.subr.mxu0 %v288
  %616 = vmatpush1.msra.mxu0 %v287
  %617 = vmatprep.subr.mxu0 %v290
  %618 = vmatpush1.msra.mxu0 %v289
  %619 = vmatprep.subr.mxu0 %v292
  %620 = vmatpush1.msra.mxu0 %v291
  %621 = vmatprep.subr.mxu0 %v294
  %622 = vmatpush1.msra.mxu0 %v293
  %623 = vmatprep.subr.mxu0 %v296
  %624 = vmatpush1.msra.mxu0 %v295
  %625 = vmatprep.subr.mxu0 %v298
  %626 = vmatpush1.msra.mxu0 %v297
  %627 = vmatprep.subr.mxu0 %v300
  %628 = vmatpush1.msra.mxu0 %v299
  %629 = vmatprep.subr.mxu0 %v302
  %630 = vmatpush1.msra.mxu0 %v301
  %631 = vmatprep.subr.mxu0 %v304
  %632 = vmatpush1.msra.mxu0 %v303
  %633 = vmatprep.subr.mxu0 %v306
  %634 = vmatpush1.msra.mxu0 %v305
  %635 = vmatprep.subr.mxu0 %v308
  %636 = vmatpush1.msra.mxu0 %v307
  %637 = vmatprep.subr.mxu0 %v310
  %638 = vmatpush1.msra.mxu0 %v309
  %639 = vmatprep.subr.mxu0 %v312
  %640 = vmatpush1.msra.mxu0 %v311
  %641 = vmatprep.subr.mxu0 %v314
  %642 = vmatpush1.msra.mxu0 %v313
  %643 = vmatprep.subr.mxu0 %v316
  %644 = vmatpush1.msra.mxu0 %v315
  %645 = vmatprep.subr.mxu0 0.0
  %646 = vmatpush1.msra.mxu0 0.0
  %647 = vmatprep.subr.mxu0 0.0
  %648 = vmatpush1.msra.mxu0 0.0
  %649 = vmatprep.subr.mxu0 0.0
  %650 = vmatpush1.msra.mxu0 0.0
  %651 = vmatprep.subr.mxu0 0.0
  %652 = vmatpush1.msra.mxu0 0.0
  %653 = vmatprep.subr.mxu0 0.0
  %654 = vmatpush1.msra.mxu0 0.0
  %655 = vmatprep.subr.mxu0 0.0
  %656 = vmatpush1.msra.mxu0 0.0
  %657 = vmatprep.subr.mxu0 0.0
  %658 = vmatpush1.msra.mxu0 0.0
  %659 = vmatprep.subr.mxu0 0.0
  %660 = vmatpush1.msra.mxu0 0.0
  %661 = vmatprep.subr.mxu0 0.0
  %662 = vmatpush1.msra.mxu0 0.0
  %663 = vmatprep.subr.mxu0 0.0
  %664 = vmatpush1.msra.mxu0 0.0
  %665 = vmatprep.subr.mxu0 0.0
  %666 = vmatpush1.msra.mxu0 0.0
  %667 = vmatprep.subr.mxu0 0.0
  %668 = vmatpush1.msra.mxu0 0.0
  %669 = vmatprep.subr.mxu0 0.0
  %670 = vmatpush1.msra.mxu0 0.0
  %671 = vmatprep.subr.mxu0 0.0
  %672 = vmatpush1.msra.mxu0 0.0
  %673 = vmatprep.subr.mxu0 0.0
  %674 = vmatpush1.msra.mxu0 0.0
  %675 = vmatprep.subr.mxu0 0.0
  %676 = vmatpush1.msra.mxu0 0.0
  %677 = vmatprep.mubr.f32.mxu0 0.0
  %678 = vmatmul.mubr.f32.gmra.mrb[0].mxu0 %v28
  %v679 = vpop.f32.mrb[0].mxu0
  %v680 = vadd.f32 %v609, %v679
  %v681 = vpop.f32.mrb[0].mxu0
  %v682 = vadd.f32 %v611, %v681
  %683 = vdwg.mxu0
  %v684 = vmax.f32 %v680, 0.0
  %v685 = vmax.f32 %v682, 0.0
  %v686 = vld [vmem:[%s3] sm:$0xff]
  %v687 = vld [vmem:[%s3 + $0x8] sm:$0xff]
  %v688 = vld [vmem:[%s3 + $0x10] sm:$0xff]
  %v689 = vld [vmem:[%s3 + $0x18] sm:$0xff]
  %v690 = vld [vmem:[%s3 + $0x20] sm:$0xff]
  %v691 = vld [vmem:[%s3 + $0x28] sm:$0xff]
  %v692 = vld [vmem:[%s3 + $0x30] sm:$0xff]
  %v693 = vld [vmem:[%s3 + $0x38] sm:$0xff]
  %v694 = vld [vmem:[%s3 + $0x40] sm:$0xff]
  %v695 = vld [vmem:[%s3 + $0x48] sm:$0xff]
  %v696 = vld [vmem:[%s3 + $0x50] sm:$0xff]
  %v697 = vld [vmem:[%s3 + $0x58] sm:$0xff]
  %v698 = vld [vmem:[%s3 + $0x60] sm:$0xff]
  %v699 = vld [vmem:[%s3 + $0x68] sm:$0xff]
  %v700 = vld [vmem:[%s3 + $0x70] sm:$0xff]
  %v701 = vld [vmem:[%s3 + $0x78] sm:$0xff]
  %v702 = vld [vmem:[%s3 + $0x80] sm:$0xff]
  %v703 = vld [vmem:[%s3 + $0x88] sm:$0xff]
  %v704 = vld [vmem:[%s3 + $0x90] sm:$0xff]
  %v705 = vld [vmem:[%s3 + $0x98] sm:$0xff]
  %v706 = vld [vmem:[%s3 + $0xa0] sm:$0xff]
  %v707 = vld [vmem:[%s3 + $0xa8] sm:$0xff]
  %v708 = vld [vmem:[%s3 + $0xb0] sm:$0xff]
  %v709 = vld [vmem:[%s3 + $0xb8] sm:$0xff]
  %v710 = vld [vmem:[%s3 + $0xc0] sm:$0xff]
  %v711 = vld [vmem:[%s3 + $0xc8] sm:$0xff]
  %v712 = vld [vmem:[%s3 + $0xd0] sm:$0xff]
  %v713 = vld [vmem:[%s3 + $0xd8] sm:$0xff]
  %v714 = vld [vmem:[%s3 + $0xe0] sm:$0xff]
  %v715 = vld [vmem:[%s3 + $0xe8] sm:$0xff]
  %v716 = vld [vmem:[%s3 + $0xf0] sm:$0xff]
  %v717 = vld [vmem:[%s3 + $0xf8] sm:$0xff]
  %v718 = vld [vmem:[%s4] sm:$0x1]
  %v720 = vlaneseq
  %v721 = vshrl.u32 %v720, 7
  %v722 = vsub.s32 0, %v721
  %v723 = vrot.slane %v718, %v722
  %725 = vmatprep.subr.mxu0 0.0
  %726 = vmatpush1.msra.mxu0 %v686
  %727 = vmatprep.subr.mxu0 0.0
  %728 = vmatpush1.msra.mxu0 %v687
  %729 = vmatprep.subr.mxu0 0.0
  %730 = vmatpush1.msra.mxu0 %v688
  %731 = vmatprep.subr.mxu0 0.0
  %732 = vmatpush1.msra.mxu0 %v689
  %733 = vmatprep.subr.mxu0 0.0
  %734 = vmatpush1.msra.mxu0 %v690
  %735 = vmatprep.subr.mxu0 0.0
  %736 = vmatpush1.msra.mxu0 %v691
  %737 = vmatprep.subr.mxu0 0.0
  %738 = vmatpush1.msra.mxu0 %v692
  %739 = vmatprep.subr.mxu0 0.0
  %740 = vmatpush1.msra.mxu0 %v693
  %741 = vmatprep.subr.mxu0 0.0
  %742 = vmatpush1.msra.mxu0 %v694
  %743 = vmatprep.subr.mxu0 0.0
  %744 = vmatpush1.msra.mxu0 %v695
  %745 = vmatprep.subr.mxu0 0.0
  %746 = vmatpush1.msra.mxu0 %v696
  %747 = vmatprep.subr.mxu0 0.0
  %748 = vmatpush1.msra.mxu0 %v697
  %749 = vmatprep.subr.mxu0 0.0
  %750 = vmatpush1.msra.mxu0 %v698
  %751 = vmatprep.subr.mxu0 0.0
  %752 = vmatpush1.msra.mxu0 %v699
  %753 = vmatprep.subr.mxu0 0.0
  %754 = vmatpush1.msra.mxu0 %v700
  %755 = vmatprep.subr.mxu0 0.0
  %756 = vmatpush1.msra.mxu0 %v701
  %757 = vmatprep.subr.mxu0 0.0
  %758 = vmatpush1.msra.mxu0 %v702
  %759 = vmatprep.subr.mxu0 0.0
  %760 = vmatpush1.msra.mxu0 %v703
  %761 = vmatprep.subr.mxu0 0.0
  %762 = vmatpush1.msra.mxu0 %v704
  %763 = vmatprep.subr.mxu0 0.0
  %764 = vmatpush1.msra.mxu0 %v705
  %765 = vmatprep.subr.mxu0 0.0
  %766 = vmatpush1.msra.mxu0 %v706
  %767 = vmatprep.subr.mxu0 0.0
  %768 = vmatpush1.msra.mxu0 %v707
  %769 = vmatprep.subr.mxu0 0.0
  %770 = vmatpush1.msra.mxu0 %v708
  %771 = vmatprep.subr.mxu0 0.0
  %772 = vmatpush1.msra.mxu0 %v709
  %773 = vmatprep.subr.mxu0 0.0
  %774 = vmatpush1.msra.mxu0 %v710
  %775 = vmatprep.subr.mxu0 0.0
  %776 = vmatpush1.msra.mxu0 %v711
  %777 = vmatprep.subr.mxu0 0.0
  %778 = vmatpush1.msra.mxu0 %v712
  %779 = vmatprep.subr.mxu0 0.0
  %780 = vmatpush1.msra.mxu0 %v713
  %781 = vmatprep.subr.mxu0 0.0
  %782 = vmatpush1.msra.mxu0 %v714
  %783 = vmatprep.subr.mxu0 0.0
  %784 = vmatpush1.msra.mxu0 %v715
  %785 = vmatprep.subr.mxu0 0.0
  %786 = vmatpush1.msra.mxu0 %v716
  %787 = vmatprep.subr.mxu0 0.0
  %788 = vmatpush1.msra.mxu0 %v717
  %789 = vmatprep.mubr.f32.mxu0 %v685
  %790 = vmatmul.mubr.f32.gmra.mrb[0].mxu0 %v684
  %v791 = vpop.f32.mrb[0].mxu0
  %v792 = vadd.f32 %v723, %v791
  %v793 = vpop.f32.mrb[0].mxu0
  %794 = vdwg.mxu0
  %795 = vst [vmem:[%s5] sm:$0xff] %v792
  // Predicated region
  $region22: #{parser_model_forward.1} parent=0 // pred_check
    _
  $region23: #{parser_model_forward.1} parent=0 // pred_check_branch
    %797 = sbr.rel (0) target = $region25
  $region24: #{parser_model_forward.1} parent=0 // pred_region
    _
  $region25: #{parser_model_forward.1} parent=0 // pred_fallthru
    _
  // Predicated region
  $region26: #{parser_model_forward.1} parent=0 // pred_check
    _
  $region27: #{parser_model_forward.1} parent=0 // pred_check_branch
    %799 = sbr.rel (0) target = $region29
  $region28: #{parser_model_forward.1} parent=0 // pred_region
    _
  $region29: #{parser_model_forward.1} parent=0 // pred_fallthru
    _

</llo_original>
